<compile_context>
chip_gen: v5e
topology: v5e:2x2
jax: 0.10.0
libtpu: 0.0.40
codegen_flags: <defaults>
</compile_context>

<pallas_src>
import functools

import jax
import jax.numpy as jnp
from jax.experimental import pallas as pl
from jax.experimental.pallas import tpu as pltpu


def _round_up(x, m):
    return ((x + m - 1) // m) * m


# ----------------------------- Pallas kernels -----------------------------

def _gcn_glu_kernel(adj_ref, y_ref, b_ref, out_ref, acc_ref):
    # adj_ref: (TV, KC)        row/col tile of the padded adjacency
    # y_ref:   (KC, 2*NF)      pre-applied Linear output, [lhs | rhs] halves
    # b_ref:   (1, 2*NF) f32   bias in the same lane layout
    # out_ref: (TV, NF)
    # acc_ref: (TV, 2*NF) f32  accumulator across the K grid axis
    k = pl.program_id(1)

    @pl.when(k == 0)
    def _():
        acc_ref[...] = jnp.zeros_like(acc_ref)

    acc_ref[...] += jnp.dot(adj_ref[...], y_ref[...],
                            preferred_element_type=jnp.float32)

    @pl.when(k == pl.num_programs(1) - 1)
    def _():
        nf = out_ref.shape[-1]
        z = acc_ref[...] + b_ref[...]
        lhs = z[:, :nf]                      # static, 128-lane-aligned slices
        rhs = z[:, nf:]
        out_ref[...] = (lhs * jax.nn.sigmoid(rhs)).astype(out_ref.dtype)


def _gcn_relu_kernel(adj_ref, y_ref, b_ref, out_ref, acc_ref):
    k = pl.program_id(1)

    @pl.when(k == 0)
    def _():
        acc_ref[...] = jnp.zeros_like(acc_ref)

    acc_ref[...] += jnp.dot(adj_ref[...], y_ref[...],
                            preferred_element_type=jnp.float32)

    @pl.when(k == pl.num_programs(1) - 1)
    def _():
        z = acc_ref[...] + b_ref[...]
        out_ref[...] = jnp.maximum(z, 0.0).astype(out_ref.dtype)


# ------------------------------ JAX wrapper -------------------------------

@functools.partial(jax.jit,
                   static_argnames=("activation", "row_tile", "k_tile",
                                    "use_bf16"))
def gcn_operation(data, adj, weight, bias, *, activation, row_tile=256,
                  k_tile=512, use_bf16=False):
    """Pallas GcnOperation forward.

    data:   (B, V, Fin) float32
    adj:    (V, V)      float32
    weight: (Cout, Fin) float32  -- PyTorch nn.Linear weight layout
    bias:   (Cout,)     float32
    activation: 'GLU' or 'relu'
    Returns (B, V, num_of_filter).
    """
    assert activation in ("GLU", "relu")
    B, V, Fin = data.shape
    Cout = weight.shape[0]
    fout = Cout // 2 if activation == "GLU" else Cout

    # ---- tiling / padding (layout plumbing lives in the wrapper) ----
    tv = min(_round_up(row_tile, 8), _round_up(V, 8))   # row tile (sublanes)
    vp_r = _round_up(V, tv)                              # padded output rows

    v8 = _round_up(V, 8)
    if v8 <= k_tile:                     # single K step: full-extent block ok
        kc = v8
    else:                                # K-tiled: lane-aligned tile
        kc = max(128, _round_up(k_tile, 128))
    vp_k = _round_up(V, kc)              # padded contraction extent

    nf = _round_up(B * fout, 128)        # lane-padded per-half output width
    n_total = 2 * nf if activation == "GLU" else nf

    compute_dtype = jnp.bfloat16 if use_bf16 else data.dtype

    # Pre-apply the Linear (weight only; bias added after aggregation, which is
    # exactly what (adj@X)@W + b computes) and lay out as (V, B*fout).
    def to_lane_layout(y_bvf):                   # (B,V,fout) -> (vp_k, nf)
        y = jnp.transpose(y_bvf, (1, 0, 2)).reshape(V, B * fout)
        return jnp.zeros((vp_k, nf), y.dtype).at[:V, :B * fout].set(y)

    def lane_bias(b_half):                       # (fout,) -> (1, nf) f32
        bb = jnp.tile(b_half, B)                 # (B*fout,)
        return jnp.zeros((1, nf), jnp.float32).at[0, :B * fout].set(bb)

    if activation == "GLU":
        kernel = _gcn_glu_kernel
        y_lhs = jnp.einsum("bvf,cf->bvc", data, weight[:fout])
        y_rhs = jnp.einsum("bvf,cf->bvc", data, weight[fout:])
        y_big = jnp.concatenate([to_lane_layout(y_lhs), to_lane_layout(y_rhs)],
                                axis=1)                       # (vp_k, 2*nf)
        b_big = jnp.concatenate([lane_bias(bias[:fout]), lane_bias(bias[fout:])],
                                axis=1)                       # (1, 2*nf)
    else:
        kernel = _gcn_relu_kernel
        y_big = to_lane_layout(jnp.einsum("bvf,cf->bvc", data, weight))
        b_big = lane_bias(bias)

    y_big = y_big.astype(compute_dtype)

    # adj zero-padded to (vp_r, vp_k); padded rows/cols contribute exact zeros.
    adj_p = jnp.zeros((vp_r, vp_k), adj.dtype).at[:V, :V].set(adj)
    adj_p = adj_p.astype(compute_dtype)

    adj_spec = pl.BlockSpec((tv, kc), lambda i, k: (i, k))
    y_spec = pl.BlockSpec((kc, n_total), lambda i, k: (k, 0))
    b_spec = pl.BlockSpec((1, n_total), lambda i, k: (0, 0))
    out_spec = pl.BlockSpec((tv, nf), lambda i, k: (i, 0))

    # VMEM budget: double-buffered input/output blocks + accumulator scratch,
    # 25% headroom, capped at 3/4 of physical VMEM (64 MiB v7x, 128 MiB v5e/v6e).
    itemsize = jnp.dtype(compute_dtype).itemsize
    est = (2 * tv * kc * itemsize            # adj tile (double-buffered)
           + 2 * kc * n_total * itemsize     # Y tile   (double-buffered)
           + 2 * n_total * 4                 # bias     (tiny)
           + 2 * tv * nf * 4                 # out tile (double-buffered, f32)
           + tv * n_total * 4)               # f32 accumulator scratch
    try:
        vmem_phys = int(pltpu.get_tpu_info().vmem_capacity_bytes)
    except Exception:
        vmem_phys = 64 * 2**20               # conservative (v7x)
    vmem_limit = int(min((3 * vmem_phys) // 4,
                         max(32 * 2**20, (5 * est) // 4)))

    out_pad = pl.pallas_call(
        kernel,
        out_shape=jax.ShapeDtypeStruct((vp_r, nf), jnp.float32),
        grid=(vp_r // tv, vp_k // kc),
        in_specs=[adj_spec, y_spec, b_spec],
        out_specs=out_spec,
        scratch_shapes=[pltpu.VMEM((tv, n_total), jnp.float32)],
        compiler_params=pltpu.CompilerParams(
            dimension_semantics=("parallel", "arbitrary"),
            vmem_limit_bytes=vmem_limit),
    )(adj_p, y_big, b_big)

    # (vp_r, nf) -> (V, B*fout) -> (B, V, fout).  Keep the [:V, :B*fout] slice:
    # padded rows hold bias-only / sigmoid(bias) garbage by construction.
    out = out_pad[:V, :B * fout].reshape(V, B, fout).transpose(1, 0, 2)
    return out.astype(data.dtype)


# ---------------------------- pure-JAX reference ---------------------------

def gcn_operation_ref(data, adj, weight, bias, *, activation):
    h = jnp.einsum("vw,bwf->bvf", adj, data)
    z = jnp.einsum("bvf,cf->bvc", h, weight) + bias
    if activation == "GLU":
        f = weight.shape[0] // 2
        return z[..., :f] * jax.nn.sigmoid(z[..., f:])
    return jnp.maximum(z, 0.0)


# ---------------------------------- main -----------------------------------

if __name__ == "__main__":
    # Small, module-consistent shapes.
    B = 2                # batch
    V = 16               # num_of_vertices (the "3N" axis in STSGCN)
    Fin = 4              # num_of_features
    Fout = 8             # num_of_filter

    key = jax.random.PRNGKey(0)
    k_data, k_adj, k_wg, k_bg, k_wr, k_br = jax.random.split(key, 6)

    data = jax.random.normal(k_data, (B, V, Fin), dtype=jnp.float32)
    adj = jax.random.normal(k_adj, (V, V), dtype=jnp.float32)

    def xavier(k, shape):
        fan_out, fan_in = shape
        bound = (6.0 / (fan_in + fan_out)) ** 0.5
        return jax.random.uniform(k, shape, jnp.float32, -bound, bound)

    # GLU: Linear(Fin -> 2*Fout);  relu: Linear(Fin -> Fout)
    w_glu = xavier(k_wg, (2 * Fout, Fin))
    b_glu = jax.random.uniform(k_bg, (2 * Fout,), jnp.float32, -0.1, 0.1)
    w_relu = xavier(k_wr, (Fout, Fin))
    b_relu = jax.random.uniform(k_br, (Fout,), jnp.float32, -0.1, 0.1)

    # GLU branch (f32); row_tile=8 -> row grid of 2 so v7x's two cores both work.
    out_glu = jax.block_until_ready(
        gcn_operation(data, adj, w_glu, b_glu, activation="GLU", row_tile=8))
    ref_glu = gcn_operation_ref(data, adj, w_glu, b_glu, activation="GLU")
    assert out_glu.shape == (B, V, Fout)
    assert jnp.allclose(out_glu, ref_glu, atol=1e-4, rtol=1e-4)

    # relu branch (f32)
    out_relu = jax.block_until_ready(
        gcn_operation(data, adj, w_relu, b_relu, activation="relu", row_tile=8))
    ref_relu = gcn_operation_ref(data, adj, w_relu, b_relu, activation="relu")
    assert out_relu.shape == (B, V, Fout)
    assert jnp.allclose(out_relu, ref_relu, atol=1e-4, rtol=1e-4)

    # Default-tile path (row_tile=256 collapses to a single full-V row tile here).
    out_def = jax.block_until_ready(
        gcn_operation(data, adj, w_glu, b_glu, activation="GLU"))
    assert jnp.allclose(out_def, ref_glu, atol=1e-4, rtol=1e-4)

    # Optional bf16 MXU-input path (f32 accumulation); Linear is pre-applied in
    # f32 in the wrapper, only adj / Y are bf16 -> looser tolerance.
    out_bf16 = jax.block_until_ready(
        gcn_operation(data, adj, w_glu, b_glu, activation="GLU", row_tile=8,
                      use_bf16=True))
    assert out_bf16.shape == (B, V, Fout)
    assert jnp.allclose(out_bf16, ref_glu, atol=2e-1, rtol=2e-1)

    print("KERNEL_OK")
</pallas_src>

<mosaic_0001>
module attributes {stable_mosaic.version = 11 : i64} {
  func.func @_gcn_glu_kernel(%arg0: i32, %arg1: i32, %arg2: memref<8x16xf32, #tpu.memory_space<vmem>>, %arg3: memref<16x256xf32, #tpu.memory_space<vmem>>, %arg4: memref<1x256xf32, #tpu.memory_space<vmem>>, %arg5: memref<8x128xf32, #tpu.memory_space<vmem>>, %arg6: memref<8x256xf32, #tpu.memory_space<vmem>>) attributes {dimension_semantics = [#tpu.dimension_semantics<parallel>, #tpu.dimension_semantics<arbitrary>], iteration_bounds = array<i64: 2, 1>, scalar_prefetch = 0 : i64, scratch_operands = 1 : i64, tpu.core_type = #tpu.core_type<tc>, window_params = [{transform_indices = @transform_0, window_bounds = array<i64: 8, 16>}, {transform_indices = @transform_1, window_bounds = array<i64: 16, 256>}, {pipeline_mode = #tpu.pipeline_mode<synchronous>, transform_indices = @transform_2, window_bounds = array<i64: 1, 256>}, {transform_indices = @transform_3, window_bounds = array<i64: 8, 128>}]} {
    %c0_i32 = arith.constant 0 : i32
    %0 = arith.cmpi eq, %arg1, %c0_i32 : i32
    %1 = arith.extui %0 : i1 to i32
    %c0_i32_0 = arith.constant 0 : i32
    %2 = arith.cmpi ne, %1, %c0_i32_0 : i32
    scf.if %2 {
      %cst_10 = arith.constant 0.000000e+00 : f32
      %12 = vector.broadcast %cst_10 : f32 to vector<8x256xf32>
      %c0_11 = arith.constant 0 : index
      %c0_12 = arith.constant 0 : index
      %13 = vector.load %arg6[%c0_11, %c0_12] : memref<8x256xf32, #tpu.memory_space<vmem>>, vector<8x256xf32>
      tpu.vector_store %arg6[%c0_11, %c0_12], %12 {strides = array<i32>} : memref<8x256xf32, #tpu.memory_space<vmem>>, vector<8x256xf32>,
    } else {
    }
    %c0 = arith.constant 0 : index
    %c0_1 = arith.constant 0 : index
    %3 = vector.load %arg6[%c0, %c0_1] : memref<8x256xf32, #tpu.memory_space<vmem>>, vector<8x256xf32>
    %c0_2 = arith.constant 0 : index
    %c0_3 = arith.constant 0 : index
    %4 = vector.load %arg2[%c0_2, %c0_3] : memref<8x16xf32, #tpu.memory_space<vmem>>, vector<8x16xf32>
    %c0_4 = arith.constant 0 : index
    %c0_5 = arith.constant 0 : index
    %5 = vector.load %arg3[%c0_4, %c0_5] : memref<16x256xf32, #tpu.memory_space<vmem>>, vector<16x256xf32>
    %cst = arith.constant dense<0.000000e+00> : vector<8x256xf32>
    %6 = tpu.matmul %4, %5, %cst {dimension_numbers = #tpu.dot_dimension_numbers<[1], [0], [0], [1], [0, 0, 1, 1], [], []>} : vector<8x16xf32>, vector<16x256xf32>, vector<8x256xf32> -> vector<8x256xf32>
    %7 = arith.addf %3, %6 : vector<8x256xf32>
    %c0_6 = arith.constant 0 : index
    %c0_7 = arith.constant 0 : index
    %8 = vector.load %arg6[%c0_6, %c0_7] : memref<8x256xf32, #tpu.memory_space<vmem>>, vector<8x256xf32>
    tpu.vector_store %arg6[%c0_6, %c0_7], %7 {strides = array<i32>} : memref<8x256xf32, #tpu.memory_space<vmem>>, vector<8x256xf32>,
    %c0_i32_8 = arith.constant 0 : i32
    %9 = arith.cmpi eq, %arg1, %c0_i32_8 : i32
    %10 = arith.extui %9 : i1 to i32
    %c0_i32_9 = arith.constant 0 : i32
    %11 = arith.cmpi ne, %10, %c0_i32_9 : i32
    scf.if %11 {
      %c0_10 = arith.constant 0 : index
      %c0_11 = arith.constant 0 : index
      %12 = vector.load %arg6[%c0_10, %c0_11] : memref<8x256xf32, #tpu.memory_space<vmem>>, vector<8x256xf32>
      %c0_12 = arith.constant 0 : index
      %c0_13 = arith.constant 0 : index
      %13 = vector.load %arg4[%c0_12, %c0_13] : memref<1x256xf32, #tpu.memory_space<vmem>>, vector<1x256xf32>
      %14 = vector.broadcast %13 : vector<1x256xf32> to vector<8x256xf32>
      %15 = arith.addf %12, %14 : vector<8x256xf32>
      %16 = vector.extract_strided_slice %15 {offsets = [0, 0], sizes = [8, 128], strides = [1, 1]} : vector<8x256xf32> to vector<8x128xf32>
      %17 = vector.extract_strided_slice %15 {offsets = [0, 128], sizes = [8, 128], strides = [1, 1]} : vector<8x256xf32> to vector<8x128xf32>
      %18 = arith.negf %17 : vector<8x128xf32>
      %19 = math.exp %18 : vector<8x128xf32>
      %cst_14 = arith.constant 1.000000e+00 : f32
      %20 = vector.broadcast %cst_14 : f32 to vector<8x128xf32>
      %21 = arith.addf %20, %19 : vector<8x128xf32>
      %22 = arith.divf %20, %21 : vector<8x128xf32>
      %23 = arith.mulf %16, %22 : vector<8x128xf32>
      %c0_15 = arith.constant 0 : index
      %c0_16 = arith.constant 0 : index
      %24 = vector.load %arg5[%c0_15, %c0_16] : memref<8x128xf32, #tpu.memory_space<vmem>>, vector<8x128xf32>
      tpu.vector_store %arg5[%c0_15, %c0_16], %23 {strides = array<i32>} : memref<8x128xf32, #tpu.memory_space<vmem>>, vector<8x128xf32>,
    } else {
    }
    return
  }
  func.func @transform_0(%arg0: i32, %arg1: i32) -> (i32, i32) {
    %c0_i32 = arith.constant 0 : i32
    return %arg0, %arg1 : i32, i32
  }
  func.func @transform_1(%arg0: i32, %arg1: i32) -> (i32, i32) {
    %c0_i32 = arith.constant 0 : i32
    %c0_i32_0 = arith.constant 0 : i32
    return %arg1, %c0_i32 : i32, i32
  }
  func.func @transform_2(%arg0: i32, %arg1: i32) -> (i32, i32) {
    %c0_i32 = arith.constant 0 : i32
    %c0_i32_0 = arith.constant 0 : i32
    %c0_i32_1 = arith.constant 0 : i32
    return %c0_i32, %c0_i32_0 : i32, i32
  }
  func.func @transform_3(%arg0: i32, %arg1: i32) -> (i32, i32) {
    %c0_i32 = arith.constant 0 : i32
    %c0_i32_0 = arith.constant 0 : i32
    return %arg0, %c0_i32 : i32, i32
  }
}

</mosaic_0001>

<llo_original>
// kernel: gcn_operation.1
$region0: #{gcn_operation.1}
  #allocation0 [shape = 'u32[]', space=smem, size = 0x4, offset = 0x4, fixed_abs, tag = 'smem constant byte address 0x4 - core index']
  #allocation1 [shape = 'u32[72,128]{1,0:T(1,128)}', space=vmem, size = 0x9000, scoped, tag = 'internal scratch']
  #allocation2 [shape = 'f32[8,256]{1,0:T(8,128)}', space=vmem, size = 0x2000, scoped, tag = 'scratch operand']
  %s0 = inlined_call_operand.vmem [shape: f32[16,16], index: 0, kind: input, shape index: {}]
  %s1 = inlined_call_operand.vmem [shape: f32[16,256], index: 1, kind: input, shape index: {}]
  %s2 = inlined_call_operand.vmem [shape: f32[1,256], index: 2, kind: input, shape index: {}]
  %s3 = inlined_call_operand.vmem [shape: f32[16,128], index: 3, kind: output, shape index: {}]
  %s4 = sld [smem:[#allocation0]]
  $region53: #{gcn_operation.1} parent=0
    _
  %s6 = ssub.s32 1, %s4
  %s7 = scalar_select 0, %s6, %s4
  loop: start=0, step=1, limit=4
  $region2: #{gcn_operation.1} parent=0 // loop_pre_header
    _
  $region3: #{gcn_operation.1} parent=0 // loop_header
    %s9 = sphi 0, %s13
    %p10 = scmp.ge.s32.totalorder %s9, 4
    %s16 = sphi 0, %s28
    %s17 = sphi 0, %s24
    %s18 = sphi 0, %s16
    %s19 = sphi 0, %s17
    %s20 = sphi 0, %s18
    %s21 = sphi 0, %s19
    %s33 = sphi 0, %s35
    %s36 = sphi 0, %s33
    %s37 = sphi 0, %s36
    %s53 = sphi 0, %s37
    %s59 = sphi 0, %s61
    %s62 = sphi 0, %s59
    %s63 = sphi 0, %s62
    %s79 = sphi 0, %s63
    %s83 = sphi 0, %s83
    %s85 = sphi 0, %s83
    %s86 = sphi 0, %s85
    %s100 = sphi 0, %s86
    %s106 = sphi 0, %s108
    %s109 = sphi 0, %s106
    %s110 = sphi 0, %s109
    %s126 = sphi 0, %s110
  $region4: #{gcn_operation.1} parent=0 // loop_header_branch
    %12 = sbr.rel (%p10) target = $region8
  $region5: #{gcn_operation.1} parent=0 // loop_body
    %s14 = ssub.s32 %s9, 1
    %s15 = ssub.s32 %s9, 2
    %s22 = sadd.s32 1, %s17
    %p23 = scmp.ge.s32.totalorder %s22, 1
    %s24 = scalar_select %p23, 0, %s22
    %s25 = sadd.s32 1, %s16
    %s26 = scalar_select %p23, %s25, %s16
    %p27 = scmp.ge.s32.totalorder %s26, 2
    %s28 = scalar_select %p27, 0, %s26
    %s29 = ssub.s32 %s16, %s28
    %s30 = ssub.s32 %s17, %s24
    %s31 = sor.u32 %s29, %s30
    %p32 = scmp.eq.s32.totalorder %s31, 0
    %s34 = sadd.s32 %s33, 1
    %s35 = scalar_select %p32, %s33, %s34
    %p38 = pneg %p32
    %p39 = scmp.eq.s32.totalorder %s9, 1
    %p40 = por %p38, %p39
    %p41 = scmp.ne.s32.totalorder %s33, %s36
    %p42 = scmp.eq.s32.totalorder %s9, 0
    %p43 = por %p41, %p42
    %p44 = scmp.ne.s32.totalorder %s33, %s36
    %p45 = scmp.eq.s32.totalorder %s14, 1
    %p46 = por %p44, %p45
    %p47 = scmp.ne.s32.totalorder %s36, %s37
    %p48 = scmp.eq.s32.totalorder %s14, 0
    %p49 = por %p47, %p48
    %p50 = scmp.ne.s32.totalorder %s36, %s37
    %p51 = scmp.eq.s32.totalorder %s15, 1
    %p52 = por %p50, %p51
    %p54 = scmp.ne.s32.totalorder %s37, %s53
    %p55 = scmp.eq.s32.totalorder %s15, 0
    %p56 = por %p54, %p55
    %s57 = ssub.s32 %s17, %s24
    %p58 = scmp.eq.s32.totalorder %s57, 0
    %s60 = sadd.s32 %s59, 1
    %s61 = scalar_select %p58, %s59, %s60
    %p64 = pneg %p58
    %p65 = scmp.eq.s32.totalorder %s9, 1
    %p66 = por %p64, %p65
    %p67 = scmp.ne.s32.totalorder %s59, %s62
    %p68 = scmp.eq.s32.totalorder %s9, 0
    %p69 = por %p67, %p68
    %p70 = scmp.ne.s32.totalorder %s59, %s62
    %p71 = scmp.eq.s32.totalorder %s14, 1
    %p72 = por %p70, %p71
    %p73 = scmp.ne.s32.totalorder %s62, %s63
    %p74 = scmp.eq.s32.totalorder %s14, 0
    %p75 = por %p73, %p74
    %p76 = scmp.ne.s32.totalorder %s62, %s63
    %p77 = scmp.eq.s32.totalorder %s15, 1
    %p78 = por %p76, %p77
    %p80 = scmp.ne.s32.totalorder %s63, %s79
    %p81 = scmp.eq.s32.totalorder %s15, 0
    %p82 = por %p80, %p81
    %s84 = sadd.s32 %s83, 1
    %p87 = scmp.eq.s32.totalorder %s9, 1
    %p88 = scmp.ne.s32.totalorder %s83, %s85
    %p89 = scmp.eq.s32.totalorder %s9, 0
    %p90 = por %p88, %p89
    %p91 = scmp.ne.s32.totalorder %s83, %s85
    %p92 = scmp.eq.s32.totalorder %s14, 1
    %p93 = por %p91, %p92
    %p94 = scmp.ne.s32.totalorder %s85, %s86
    %p95 = scmp.eq.s32.totalorder %s14, 0
    %p96 = por %p94, %p95
    %p97 = scmp.ne.s32.totalorder %s85, %s86
    %p98 = scmp.eq.s32.totalorder %s15, 1
    %p99 = por %p97, %p98
    %p101 = scmp.ne.s32.totalorder %s86, %s100
    %p102 = scmp.eq.s32.totalorder %s15, 0
    %p103 = por %p101, %p102
    %s104 = ssub.s32 %s16, %s28
    %p105 = scmp.eq.s32.totalorder %s104, 0
    %s107 = sadd.s32 %s106, 1
    %s108 = scalar_select %p105, %s106, %s107
    %p111 = pneg %p105
    %p112 = scmp.eq.s32.totalorder %s9, 1
    %p113 = por %p111, %p112
    %p114 = scmp.ne.s32.totalorder %s106, %s109
    %p115 = scmp.eq.s32.totalorder %s9, 0
    %p116 = por %p114, %p115
    %p117 = scmp.ne.s32.totalorder %s106, %s109
    %p118 = scmp.eq.s32.totalorder %s14, 1
    %p119 = por %p117, %p118
    %p120 = scmp.ne.s32.totalorder %s109, %s110
    %p121 = scmp.eq.s32.totalorder %s14, 0
    %p122 = por %p120, %p121
    %p123 = scmp.ne.s32.totalorder %s109, %s110
    %p124 = scmp.eq.s32.totalorder %s15, 1
    %p125 = por %p123, %p124
    %p127 = scmp.ne.s32.totalorder %s110, %s126
    %p128 = scmp.eq.s32.totalorder %s15, 0
    %p129 = por %p127, %p128
    %p130 = scmp.le.s32.totalorder 1, %s9
    %p131 = scmp.lt.s32.totalorder %s9, 3
    %p132 = pnand %p130, %p131
    %p133 = pneg %p132
    // Predicated region
    $region9: #{gcn_operation.1} parent=5 // pred_check
      _
    $region10: #{gcn_operation.1} parent=5 // pred_check_branch
      %135 = sbr.rel (%p132) target = $region12
    $region11: #{gcn_operation.1} parent=5 // pred_region
      %s136 = ssub.s32 %s9, 1
      // Predicated region
      $region13: #{gcn_operation.1} parent=11 // pred_check
        %p137 = pneg %p75
      $region14: #{gcn_operation.1} parent=11 // pred_check_branch
        %139 = sbr.rel (%p137) target = $region16
      $region15: #{gcn_operation.1} parent=11 // pred_region
        %s140 = smul.u32 2, %s19
        %p141 = scmp.lt.s32.totalorder %s140, 1
        %s142 = scalar_select %p141, %s140, 1
        %s143 = smul.addr %s142, 2
        %s144 = smul.addr %s143, 8
        %s145 = scalar_lea.vmem %s1, %s144
        %s146 = smul.u32 2, %s19
      $region16: #{gcn_operation.1} parent=11 // pred_fallthru
        _
      // Predicated region
      $region17: #{gcn_operation.1} parent=11 // pred_check
        %p147 = pneg %p96
      $region18: #{gcn_operation.1} parent=11 // pred_check_branch
        %149 = sbr.rel (%p147) target = $region20
      $region19: #{gcn_operation.1} parent=11 // pred_region
        _
      $region20: #{gcn_operation.1} parent=11 // pred_fallthru
        _
    $region12: #{gcn_operation.1} parent=5 // pred_fallthru
      _
    %p150 = scmp.lt.s32.totalorder %s9, 2
    // Predicated region
    $region21: #{gcn_operation.1} parent=5 // pred_check
      %p151 = pneg %p150
    $region22: #{gcn_operation.1} parent=5 // pred_check_branch
      %153 = sbr.rel (%p151) target = $region24
    $region23: #{gcn_operation.1} parent=5 // pred_region
      // Predicated region
      $region25: #{gcn_operation.1} parent=23 // pred_check
        %p154 = pneg %p43
      $region26: #{gcn_operation.1} parent=23 // pred_check_branch
        %156 = sbr.rel (%p154) target = $region28
      $region27: #{gcn_operation.1} parent=23 // pred_region
        %p157 = scmp.lt.s32.totalorder %s16, 1
        %s158 = scalar_select %p157, %s16, 1
        %p159 = scmp.lt.s32.totalorder %s17, 0
        %s160 = scalar_select %p159, %s17, 0
        %s161 = sadd.s32 %s160, %s158
        %s162 = smul.addr %s161, 8
        %s163 = scalar_lea.vmem %s0, %s162
      $region28: #{gcn_operation.1} parent=23 // pred_fallthru
        _
    $region24: #{gcn_operation.1} parent=5 // pred_fallthru
      _
    %p164 = scmp.le.s32.totalorder 1, %s9
    %p165 = scmp.lt.s32.totalorder %s9, 3
    %p166 = pnand %p164, %p165
    %p167 = pneg %p166
    // Predicated region
    $region29: #{gcn_operation.1} parent=5 // pred_check
      _
    $region30: #{gcn_operation.1} parent=5 // pred_check_branch
      %169 = sbr.rel (%p166) target = $region32
    $region31: #{gcn_operation.1} parent=5 // pred_region
      %s170 = ssub.s32 %s9, 1
      %p171 = scmp.lt.s32.totalorder %s18, 1
      %s172 = scalar_select %p171, %s18, 1
      %p173 = scmp.lt.s32.totalorder %s19, 0
      %s174 = scalar_select %p173, %s19, 0
      %s175 = sadd.s32 %s174, %s172
      %s176 = smul.addr %s175, 8
      %s177 = scalar_lea.vmem %s0, %s176
      %p178 = pneg %p49
      %p179 = pneg %p46
      %s180 = smul.u32 2, %s19
      %p181 = scmp.lt.s32.totalorder %s180, 1
      %s182 = scalar_select %p181, %s180, 1
      %s183 = smul.addr %s182, 2
      %s184 = smul.addr %s183, 8
      %s185 = scalar_lea.vmem %s1, %s184
      %p186 = pneg %p75
      %p187 = pneg %p72
      %p188 = pneg %p96
      %p189 = pneg %p93
      %p190 = pneg %p122
      %p191 = pneg %p119
      %p192 = scmp.lt.s32.totalorder %s18, 1
      %s193 = scalar_select %p192, %s18, 1
      %s194 = smul.addr %s193, 8
      %s195 = scalar_lea.vmem %s3, %s194
      %p196 = scmp.lt.s32.totalorder %s18, 1
      %s197 = scalar_select %p196, %s18, 1
      %p198 = scmp.lt.s32.totalorder %s19, 0
      %s199 = scalar_select %p198, %s19, 0
      %s200 = sadd.s32 %s199, %s197
      %s201 = smul.addr %s200, 8
      %s202 = scalar_lea.vmem %s0, %s201
      %s203 = smul.u32 2, %s19
      %p204 = scmp.lt.s32.totalorder %s203, 1
      %s205 = scalar_select %p204, %s203, 1
      %s206 = smul.addr %s205, 2
      %s207 = smul.addr %s206, 8
      %s208 = scalar_lea.vmem %s1, %s207
      %s209 = smul.u32 2, %s19
      %p210 = scmp.lt.s32.totalorder %s18, 1
      %s211 = scalar_select %p210, %s18, 1
      %s212 = smul.addr %s211, 8
      %s213 = scalar_lea.vmem %s3, %s212
      %p214 = scmp.eq.s32.totalorder %s19, 0
      // Predicated region
      $region33: #{gcn_operation.1} parent=31 // pred_check
        %p215 = pneg %p214
      $region34: #{gcn_operation.1} parent=31 // pred_check_branch
        %217 = sbr.rel (%p215) target = $region36
      $region35: #{gcn_operation.1} parent=31 // pred_region
        %218 = vst [vmem:[#allocation2] sm:$0xff] 0.0
        %219 = vst [vmem:[#allocation2 + $0x8] sm:$0xff] 0.0
      $region36: #{gcn_operation.1} parent=31 // pred_fallthru
        _
      %v220 = vld [vmem:[#allocation2] sm:$0xff]
      %v221 = vld [vmem:[#allocation2 + $0x8] sm:$0xff]
      %v222 = vld [vmem:[%s202] sm:$0xff]
      %v223 = vld [vmem:[%s208] sm:$0xff]
      %v224 = vld [vmem:[%s208 + $0x8] sm:$0xff]
      %v225 = vld [vmem:[%s208 + $0x10] sm:$0xff]
      %v226 = vld [vmem:[%s208 + $0x18] sm:$0xff]
      %vm227 = vcmask 130048
      %v229 = vsel %vm227, %v222, 0
      %231 = vmatpush.msra.mxu0 0.0
      %232 = vmatpush.msra.mxu0 0.0
      %233 = vmatpush.msra.mxu0 0.0
      %234 = vmatpush.msra.mxu0 0.0
      %235 = vmatpush.msra.mxu0 0.0
      %236 = vmatpush.msra.mxu0 0.0
      %237 = vmatpush.msra.mxu0 0.0
      %238 = vmatpush.msra.mxu0 0.0
      %239 = vmatpush.msra.mxu0 0.0
      %240 = vmatpush.msra.mxu0 0.0
      %241 = vmatpush.msra.mxu0 0.0
      %242 = vmatpush.msra.mxu0 0.0
      %243 = vmatpush.msra.mxu0 0.0
      %244 = vmatpush.msra.mxu0 0.0
      %245 = vmatpush.msra.mxu0 %v225
      %246 = vmatpush.msra.mxu0 %v223
      %247 = vmatmul.f32.gmra.mxu0 %v229
      %v248 = vpop.f32.mrf.mxu0
      %v249 = vadd.f32 0.0, %v248
      %250 = vdwg.mxu0
      %251 = vmatpush.msra.mxu0 0.0
      %252 = vmatpush.msra.mxu0 0.0
      %253 = vmatpush.msra.mxu0 0.0
      %254 = vmatpush.msra.mxu0 0.0
      %255 = vmatpush.msra.mxu0 0.0
      %256 = vmatpush.msra.mxu0 0.0
      %257 = vmatpush.msra.mxu0 0.0
      %258 = vmatpush.msra.mxu0 0.0
      %259 = vmatpush.msra.mxu0 0.0
      %260 = vmatpush.msra.mxu0 0.0
      %261 = vmatpush.msra.mxu0 0.0
      %262 = vmatpush.msra.mxu0 0.0
      %263 = vmatpush.msra.mxu0 0.0
      %264 = vmatpush.msra.mxu0 0.0
      %265 = vmatpush.msra.mxu0 %v226
      %266 = vmatpush.msra.mxu0 %v224
      %267 = vmatmul.f32.gmra.mxu0 %v229
      %v268 = vpop.f32.mrf.mxu0
      %v269 = vadd.f32 0.0, %v268
      %270 = vdwg.mxu0
      %v271 = vadd.f32 %v220, %v249
      %v272 = vadd.f32 %v221, %v269
      %273 = vst [vmem:[#allocation2] sm:$0xff] %v271
      %274 = vst [vmem:[#allocation2 + $0x8] sm:$0xff] %v272
      // Predicated region
      $region37: #{gcn_operation.1} parent=31 // pred_check
        %p275 = pneg %p214
      $region38: #{gcn_operation.1} parent=31 // pred_check_branch
        %277 = sbr.rel (%p275) target = $region40
      $region39: #{gcn_operation.1} parent=31 // pred_region
        %v278 = vld [vmem:[#allocation2] sm:$0xff]
        %v279 = vld [vmem:[#allocation2 + $0x8] sm:$0xff]
        %v280 = vld [vmem:[%s2] sm:$0x3]
        %v282 = vperm.slane %v280, 0
        %v283 = vperm.slane %v280, 1
        %v286 = vadd.f32 %v278, %v282
        %v287 = vadd.f32 %v279, %v283
        %v288 = vxor.u32 %v287, 2147483648
        %v289 = vmul.f32 %v288, 1.442695
        %v290 = vpow.pop %v289
        %v291 = vadd.f32 %v290, 1.0
        %v292 = vrcp.pop %v291
        %v293 = vmul.f32 %v291, %v292
        %v294 = vsub.f32 1.0, %v293
        %v295 = vmul.f32 %v292, %v294
        %v296 = vadd.f32 %v292, %v295
        %vm297 = vweird.f32 %v291
        %vm298 = vweird.f32 %v292
        %vm299 = vmor %vm297, %vm298
        %v300 = vsel %vm299, %v292, %v296
        %v301 = vand.u32 2147483647, %v291
        %vm302 = vcmp.eq.f32.partialorder %v301, 8.507059e+37
        %v303 = vand.u32 %v291, 2147483648
        %v304 = vor.u32 1.1754944e-38, %v303
        %v305 = vsel %vm302, %v304, %v300
        %v306 = vmul.f32 1.0, %v305
        %v307 = vmul.f32 %v286, %v306
        %308 = vst [vmem:[%s213] sm:$0xff] %v307
      $region40: #{gcn_operation.1} parent=31 // pred_fallthru
        _
      %p309 = scmp.lt.s32.totalorder %s18, 1
      %s310 = scalar_select %p309, %s18, 1
      %s311 = smul.addr %s310, 8
      %s312 = scalar_lea.vmem %s3, %s311
      // Predicated region
      $region41: #{gcn_operation.1} parent=31 // pred_check
        %p313 = pneg %p119
      $region42: #{gcn_operation.1} parent=31 // pred_check_branch
        %315 = sbr.rel (%p313) target = $region44
      $region43: #{gcn_operation.1} parent=31 // pred_region
        _
      $region44: #{gcn_operation.1} parent=31 // pred_fallthru
        _
    $region32: #{gcn_operation.1} parent=5 // pred_fallthru
      _
    %p316 = scmp.le.s32.totalorder 2, %s9
    // Predicated region
    $region45: #{gcn_operation.1} parent=5 // pred_check
      %p317 = pneg %p316
    $region46: #{gcn_operation.1} parent=5 // pred_check_branch
      %319 = sbr.rel (%p317) target = $region48
    $region47: #{gcn_operation.1} parent=5 // pred_region
      %s320 = ssub.s32 %s9, 2
      // Predicated region
      $region49: #{gcn_operation.1} parent=47 // pred_check
        %p321 = pneg %p125
      $region50: #{gcn_operation.1} parent=47 // pred_check_branch
        %323 = sbr.rel (%p321) target = $region52
      $region51: #{gcn_operation.1} parent=47 // pred_region
        %p324 = scmp.lt.s32.totalorder %s20, 1
        %s325 = scalar_select %p324, %s20, 1
        %s326 = smul.addr %s325, 8
        %s327 = scalar_lea.vmem %s3, %s326
      $region52: #{gcn_operation.1} parent=47 // pred_fallthru
        _
    $region48: #{gcn_operation.1} parent=5 // pred_fallthru
      _
  $region6: #{gcn_operation.1} parent=0 // loop_footer
    %s13 = sadd.s32 1, %s9
  $region7: #{gcn_operation.1} parent=0 // loop_footer_branch
    %8 = sbr.rel target = $region3
  $region8: #{gcn_operation.1} parent=0 // loop_exit
    _

</llo_original>
